<compile_context>
chip_gen: v6e
topology: v6e:2x2x1
jax: 0.10.0
libtpu: 0.0.40
codegen_flags: <defaults>
</compile_context>

<pallas_src>
import jax
import jax.numpy as jnp
from jax.experimental import pallas as pl
from jax.experimental.pallas import tpu as pltpu


def _round_up(x, m):
    return ((x + m - 1) // m) * m


def _linear_row_reduce_kernel(x_ref, w_ref, b_ref, o_ref):
    # x_ref: (tile_b, D) VMEM, w_ref: (1, D) VMEM, b_ref: (1,) SMEM,
    # o_ref: (1, tile_b) VMEM (lane-dense output).
    prod = x_ref[...] * w_ref[...]          # VPU, weight row broadcast over sublanes
    acc = jnp.sum(prod, axis=-1)            # XLU lane reduce -> (tile_b,)
    o_ref[...] = (acc + b_ref[0]).astype(o_ref.dtype)[None, :]


def domain_classifier_linear_forward(x, w_row, b, *, tile_b=1024):
    """Forward pass of domain_classifier_linear.

    Args:
      x:     (B, D) float32 input.
      w_row: (1, D) float32 — nn.Linear weight (already in (out=1, in=D) layout).
      b:     (1,)   float32 — nn.Linear bias.
    Returns:
      (B, 1) float32 logits.
    """
    B, D = x.shape
    assert w_row.shape == (1, D), w_row.shape
    assert b.shape == (1,), b.shape

    # Batch tiling: small batches -> single 8-aligned tile; large batches ->
    # fixed lane-dense tile (multiple of 128) iterated over the grid.
    if B <= tile_b:
        tb = _round_up(max(B, 1), 8)
        num_tiles = 1
    else:
        tb = tile_b                      # multiple of 128 for lane-dense output
        num_tiles = pl.cdiv(B, tb)
    B_pad = num_tiles * tb
    if B_pad != B:
        x = jnp.pad(x, ((0, B_pad - B), (0, 0)))

    out = pl.pallas_call(
        _linear_row_reduce_kernel,
        out_shape=jax.ShapeDtypeStruct((1, B_pad), x.dtype),
        grid_spec=pltpu.PrefetchScalarGridSpec(
            num_scalar_prefetch=0,
            grid=(num_tiles,),
            in_specs=[
                # x tile: (tile_b, D), full feature dim per block.
                pl.BlockSpec((tb, D), lambda i: (i, 0)),
                # weight row: whole (1, D), same block every grid step.
                pl.BlockSpec((1, D), lambda i: (0, 0)),
                # bias scalar lives in SMEM (no padded VMEM block).
                pl.BlockSpec(memory_space=pltpu.MemorySpace.SMEM),
            ],
            # Lane-dense output block: (1, tile_b).
            out_specs=pl.BlockSpec((1, tb), lambda i: (0, i)),
        ),
        compiler_params=pltpu.CompilerParams(
            dimension_semantics=("parallel",),
        ),
        cost_estimate=pl.CostEstimate(
            flops=2 * B_pad * D,
            transcendentals=0,
            bytes_accessed=B_pad * D * 4 + D * 4 + B_pad * 4,
        ),
    )(x, w_row, b)

    # (1, B_pad) -> (B, 1); wrapper-side reshape on B*4 bytes is negligible.
    return out.reshape(-1)[:B].reshape(B, 1)


def _reference(x, w_row, b):
    return x @ w_row.T + b[None, :]  # pure-JAX reference


if __name__ == "__main__":
    key = jax.random.PRNGKey(0)
    kx, kw, kb, kx2 = jax.random.split(key, 4)

    D = 1200  # module default input_dim=1200

    # Deterministic parameters matching nn.Linear's uniform(-1/sqrt(D), 1/sqrt(D))
    bound = 1.0 / jnp.sqrt(jnp.float32(D))
    w_row = jax.random.uniform(kw, (1, D), dtype=jnp.float32, minval=-bound, maxval=bound)
    b = jax.random.uniform(kb, (1,), dtype=jnp.float32, minval=-bound, maxval=bound)

    # --- small-batch case (single tile) ---
    B = 8
    x = jax.random.normal(kx, (B, D), dtype=jnp.float32)
    out = jax.block_until_ready(domain_classifier_linear_forward(x, w_row, b))
    ref = _reference(x, w_row, b)
    assert out.shape == (B, 1), out.shape
    assert jnp.allclose(out, ref, atol=1e-4, rtol=1e-4), "mismatch vs reference (small batch)"

    # --- larger, non-divisible batch (multi-tile grid + ragged padding path) ---
    B2 = 2500
    x2 = jax.random.normal(kx2, (B2, D), dtype=jnp.float32)
    out2 = jax.block_until_ready(domain_classifier_linear_forward(x2, w_row, b))
    ref2 = _reference(x2, w_row, b)
    assert out2.shape == (B2, 1), out2.shape
    assert jnp.allclose(out2, ref2, atol=1e-4, rtol=1e-4), "mismatch vs reference (tiled batch)"

    print("KERNEL_OK")
</pallas_src>

<mosaic_0001>
module attributes {stable_mosaic.version = 11 : i64} {
  func.func @_linear_row_reduce_kernel(%arg0: i32, %arg1: memref<8x1200xf32, #tpu.memory_space<vmem>>, %arg2: memref<1x1200xf32, #tpu.memory_space<vmem>>, %arg3: memref<1xf32, #tpu.memory_space<smem>>, %arg4: memref<1x8xf32, #tpu.memory_space<vmem>>) attributes {dimension_semantics = [#tpu.dimension_semantics<parallel>], iteration_bounds = array<i64: 1>, scalar_prefetch = 0 : i64, scratch_operands = 0 : i64, tpu.core_type = #tpu.core_type<tc>, window_params = [{transform_indices = @transform_0, window_bounds = array<i64: 8, 1200>}, {pipeline_mode = #tpu.pipeline_mode<synchronous>, transform_indices = @transform_1, window_bounds = array<i64: 1, 1200>}, {transform_indices = @transform_2, window_bounds = array<i64: 1>}, {transform_indices = @transform_3, window_bounds = array<i64: 1, 8>}]} {
    %c0 = arith.constant 0 : index
    %c0_0 = arith.constant 0 : index
    %0 = vector.load %arg1[%c0, %c0_0] : memref<8x1200xf32, #tpu.memory_space<vmem>>, vector<8x1200xf32>
    %c0_1 = arith.constant 0 : index
    %c0_2 = arith.constant 0 : index
    %1 = vector.load %arg2[%c0_1, %c0_2] : memref<1x1200xf32, #tpu.memory_space<vmem>>, vector<1x1200xf32>
    %2 = vector.broadcast %1 : vector<1x1200xf32> to vector<8x1200xf32>
    %3 = arith.mulf %0, %2 : vector<8x1200xf32>
    %cst = arith.constant dense<0.000000e+00> : vector<8xf32>
    %4 = vector.multi_reduction <add>, %3, %cst [1] : vector<8x1200xf32> to vector<8xf32>
    %c0_3 = arith.constant 0 : index
    %5 = memref.load %arg3[%c0_3] : memref<1xf32, #tpu.memory_space<smem>>
    %6 = vector.broadcast %5 : f32 to vector<8xf32>
    %7 = arith.addf %4, %6 : vector<8xf32>
    %8 = vector.shape_cast %7 : vector<8xf32> to vector<1x8xf32>
    %c0_4 = arith.constant 0 : index
    %c0_5 = arith.constant 0 : index
    %9 = vector.load %arg4[%c0_4, %c0_5] : memref<1x8xf32, #tpu.memory_space<vmem>>, vector<1x8xf32>
    tpu.vector_store %arg4[%c0_4, %c0_5], %8 {strides = array<i32>} : memref<1x8xf32, #tpu.memory_space<vmem>>, vector<1x8xf32>,
    return
  }
  func.func @transform_0(%arg0: i32) -> (i32, i32) {
    %c0_i32 = arith.constant 0 : i32
    %c0_i32_0 = arith.constant 0 : i32
    return %arg0, %c0_i32 : i32, i32
  }
  func.func @transform_1(%arg0: i32) -> (i32, i32) {
    %c0_i32 = arith.constant 0 : i32
    %c0_i32_0 = arith.constant 0 : i32
    %c0_i32_1 = arith.constant 0 : i32
    return %c0_i32, %c0_i32_0 : i32, i32
  }
  func.func @transform_2(%arg0: i32) -> i32 {
    %c0_i32 = arith.constant 0 : i32
    %c0_i32_0 = arith.constant 0 : i32
    return %c0_i32 : i32
  }
  func.func @transform_3(%arg0: i32) -> (i32, i32) {
    %c0_i32 = arith.constant 0 : i32
    %c0_i32_0 = arith.constant 0 : i32
    return %c0_i32, %arg0 : i32, i32
  }
}

</mosaic_0001>

<llo_original>
// kernel: tpu_custom_call.1
$region0: #{tpu_custom_call.1}
  #allocation0 [shape = 'u32[]', space=smem, size = 0x4, offset = 0x4, fixed_abs, tag = 'smem constant byte address 0x4 - core index']
  #allocation1 [shape = 'u32[144,128]{1,0:T(1,128)}', space=vmem, size = 0x12000, scoped, tag = 'internal scratch']
  #allocation2 [shape = 'f32[1]{0:T(128)S(6)}', space=smem, size = 0x200, scoped, tag = 'scoped memory for tpu_custom_call.1']
  %s0 = inlined_call_operand.hbm [shape: f32[8,1200], index: 0, kind: input, shape index: {}]
  %s1 = inlined_call_operand.hbm [shape: f32[1,1200], index: 1, kind: input, shape index: {}]
  %s2 = inlined_call_operand.<no memory space> [shape: f32[1], index: 2, kind: input, shape index: {}]
  %s3 = inlined_call_operand.hbm [shape: f32[1,8], index: 3, kind: output, shape index: {}]
  %s4 = sld [smem:[#allocation0]]
  $region30: #{tpu_custom_call.1} parent=0
    _
  %s6 = ssub.s32 1, %s4
  %s7 = scalar_select 0, %s6, %s4
  %8 = sst [smem:[#allocation2]] %s2
  $region1: #{tpu_custom_call.1} parent=0
    #allocation3 [shape = 'u8[40960]{0}', space=vmem, size = 0xa000, scoped, tag = 'input window, operand 0, single buffered']
    #allocation4 [shape = 's32[1]{0}', space=sflag, size = 0x4, scoped, tag = 'scoped memory for tpu_custom_call.1']
    #allocation5 [shape = 's32[1]{0}', space=sflag, size = 0x4, scoped, tag = 'scoped memory for tpu_custom_call.1']
    #allocation6 [shape = 'u8[5120]{0}', space=vmem, size = 0x1400, scoped, tag = 'input window, operand 1, single buffered']
    #allocation7 [shape = 's32[1]{0}', space=sflag, size = 0x4, scoped, tag = 'scoped memory for tpu_custom_call.1']
    #allocation8 [shape = 'u8[512]{0}', space=vmem, size = 0x400, scoped, tag = 'output window, operand 0, single buffered']
    %9 = vsyncpa [#allocation4], 0
    %10 = vsyncpa [#allocation7], 0
    %11 = vsyncpa [#allocation5], 0
    // Predicated region
    $region2: #{tpu_custom_call.1} parent=1 // pred_check
      _
    $region3: #{tpu_custom_call.1} parent=1 // pred_check_branch
      %13 = sbr.rel (0) target = $region5
    $region4: #{tpu_custom_call.1} parent=1 // pred_region
      %s15 = ssub.s32 1280, 1280
      %16 = vsyncadd [#allocation4], %s15
      %s18 = sshll.u32 [#allocation3], 4
      %s19 = int_to_ptr.vmem [resolvable:$true] %s18
      %21 = dma.hbm_to_vmem [thread:$0]  %s0, 1280, %s19, [#allocation4]
    $region5: #{tpu_custom_call.1} parent=1 // pred_fallthru
      _
    // Predicated region
    $region6: #{tpu_custom_call.1} parent=1 // pred_check
      _
    $region7: #{tpu_custom_call.1} parent=1 // pred_check_branch
      %23 = sbr.rel (0) target = $region9
    $region8: #{tpu_custom_call.1} parent=1 // pred_region
      %s25 = ssub.s32 160, 160
      %26 = vsyncadd [#allocation7], %s25
      %s28 = sshll.u32 [#allocation6], 4
      %s29 = int_to_ptr.vmem [resolvable:$true] %s28
      %31 = dma.hbm_to_vmem [thread:$0]  %s1, 160, %s29, [#allocation7]
    $region9: #{tpu_custom_call.1} parent=1 // pred_fallthru
      _
    // Predicated region
    $region10: #{tpu_custom_call.1} parent=1 // pred_check
      _
    $region11: #{tpu_custom_call.1} parent=1 // pred_check_branch
      %33 = sbr.rel (0) target = $region13
    $region12: #{tpu_custom_call.1} parent=1 // pred_region
      _
    $region13: #{tpu_custom_call.1} parent=1 // pred_fallthru
      _
    // Predicated region
    $region14: #{tpu_custom_call.1} parent=1 // pred_check
      _
    $region15: #{tpu_custom_call.1} parent=1 // pred_check_branch
      %35 = sbr.rel (0) target = $region17
    $region16: #{tpu_custom_call.1} parent=1 // pred_region
      %36 = dma.done [#allocation4], 1280
    $region17: #{tpu_custom_call.1} parent=1 // pred_fallthru
      _
    // Predicated region
    $region18: #{tpu_custom_call.1} parent=1 // pred_check
      _
    $region19: #{tpu_custom_call.1} parent=1 // pred_check_branch
      %38 = sbr.rel (0) target = $region21
    $region20: #{tpu_custom_call.1} parent=1 // pred_region
      %39 = dma.done [#allocation7], 160
    $region21: #{tpu_custom_call.1} parent=1 // pred_fallthru
      _
    %v40 = vld [vmem:[#allocation3] sm:$0xff]
    %v41 = vld [vmem:[#allocation3 + $0x8] sm:$0xff]
    %v42 = vld [vmem:[#allocation3 + $0x10] sm:$0xff]
    %v43 = vld [vmem:[#allocation3 + $0x18] sm:$0xff]
    %v44 = vld [vmem:[#allocation3 + $0x20] sm:$0xff]
    %v45 = vld [vmem:[#allocation3 + $0x28] sm:$0xff]
    %v46 = vld [vmem:[#allocation3 + $0x30] sm:$0xff]
    %v47 = vld [vmem:[#allocation3 + $0x38] sm:$0xff]
    %v48 = vld [vmem:[#allocation3 + $0x40] sm:$0xff]
    %v49 = vld [vmem:[#allocation3 + $0x48] sm:$0xff]
    %v50 = vld [vmem:[#allocation6] sm:$0xff]
    %v51 = vld [vmem:[#allocation6 + $0x8] sm:$0x3]
    %v54 = vlaneseq
    %v55 = vshrl.u32 %v54, 7
    %v56 = vsub.s32 0, %v55
    %v57 = vrot.slane %v50, %v56
    %v58 = vlaneseq
    %v59 = vshrl.u32 %v58, 7
    %v60 = vsub.s32 1, %v59
    %v61 = vrot.slane %v50, %v60
    %v62 = vlaneseq
    %v63 = vshrl.u32 %v62, 7
    %v64 = vsub.s32 2, %v63
    %v65 = vrot.slane %v50, %v64
    %v66 = vlaneseq
    %v67 = vshrl.u32 %v66, 7
    %v68 = vsub.s32 3, %v67
    %v69 = vrot.slane %v50, %v68
    %v70 = vlaneseq
    %v71 = vshrl.u32 %v70, 7
    %v72 = vsub.s32 4, %v71
    %v73 = vrot.slane %v50, %v72
    %v74 = vlaneseq
    %v75 = vshrl.u32 %v74, 7
    %v76 = vsub.s32 5, %v75
    %v77 = vrot.slane %v50, %v76
    %v78 = vlaneseq
    %v79 = vshrl.u32 %v78, 7
    %v80 = vsub.s32 6, %v79
    %v81 = vrot.slane %v50, %v80
    %v82 = vlaneseq
    %v83 = vshrl.u32 %v82, 7
    %v84 = vsub.s32 7, %v83
    %v85 = vrot.slane %v50, %v84
    %v86 = vlaneseq
    %v87 = vshrl.u32 %v86, 7
    %v88 = vsub.s32 0, %v87
    %v89 = vrot.slane %v51, %v88
    %v90 = vlaneseq
    %v91 = vshrl.u32 %v90, 7
    %v92 = vsub.s32 1, %v91
    %v93 = vrot.slane %v51, %v92
    %v104 = vmul.f32 %v40, %v57
    %v105 = vmul.f32 %v41, %v61
    %v106 = vmul.f32 %v42, %v65
    %v107 = vmul.f32 %v43, %v69
    %v108 = vmul.f32 %v44, %v73
    %v109 = vmul.f32 %v45, %v77
    %v110 = vmul.f32 %v46, %v81
    %v111 = vmul.f32 %v47, %v85
    %v112 = vmul.f32 %v48, %v89
    %v113 = vmul.f32 %v49, %v93
    %v114 = vadd.f32 %v104, %v105
    %v115 = vadd.f32 %v114, %v106
    %v116 = vadd.f32 %v115, %v107
    %v117 = vadd.f32 %v116, %v108
    %v118 = vadd.f32 %v117, %v109
    %v119 = vadd.f32 %v118, %v110
    %v120 = vadd.f32 %v119, %v111
    %v121 = vadd.f32 %v120, %v112
    %vm122 = vcmask 392192
    %v123 = vsel %vm122, %v113, 0.0
    %v124 = vadd.f32 %v121, %v123
    %125 = vadd.xlane.f32.xlu0 %v124
    %v126 = vpop.xlane.xlu0 %125
    %s127 = sld [smem:[#allocation2]]
    %v128 = vstv %s127
    %v129 = vadd.f32 %v126, %v128
    %v131 = vlaneseq
    %v132 = vand.u32 %v131, 127
    %v133 = vlaneseq
    %v134 = vshrl.u32 %v133, 7
    %v135 = vsub.s32 %v132, %v134
    %v136 = vrot.slane %v129, %v135
    %vm138 = vcmask 57344
    %139 = vst.msk [vmem:[#allocation8] sm:$0x1] %vm138, %v136
    // Predicated region
    $region22: #{tpu_custom_call.1} parent=1 // pred_check
      _
    $region23: #{tpu_custom_call.1} parent=1 // pred_check_branch
      %141 = sbr.rel (0) target = $region25
    $region24: #{tpu_custom_call.1} parent=1 // pred_region
      %s143 = ssub.s32 16, 16
      %144 = vsyncadd [#allocation5], %s143
      %s146 = sshll.u32 [#allocation8], 4
      %s147 = int_to_ptr.vmem [resolvable:$true] %s146
      %149 = dma.vmem_to_hbm [thread:$0]  %s147, 16, %s3, [#allocation5]
    $region25: #{tpu_custom_call.1} parent=1 // pred_fallthru
      _
    // Predicated region
    $region26: #{tpu_custom_call.1} parent=1 // pred_check
      _
    $region27: #{tpu_custom_call.1} parent=1 // pred_check_branch
      %151 = sbr.rel (0) target = $region29
    $region28: #{tpu_custom_call.1} parent=1 // pred_region
      %152 = dma.done [#allocation5], 16
    $region29: #{tpu_custom_call.1} parent=1 // pred_fallthru
      _
    %153 = vsyncpa [#allocation4], 1
    %154 = vsyncpa [#allocation7], 1
    %155 = vsyncpa [#allocation5], 1

</llo_original>
